<compile_context>
chip_gen: v5e
topology: v5e:2x2
jax: 0.10.0
libtpu: 0.0.40
codegen_flags: <defaults>
</compile_context>

<pallas_src>
import functools

import jax
import jax.numpy as jnp
from jax import lax
from jax.experimental import pallas as pl
from jax.experimental.pallas import tpu as pltpu


# ---------------------------------------------------------------------------
# VMEM budgeting (generation-aware, conservative fallback = v7x 64 MiB per TC).
# ---------------------------------------------------------------------------
@functools.lru_cache(maxsize=None)
def _vmem_limit_bytes():
    cap = 64 << 20  # conservative: v7x per-TensorCore physical VMEM
    try:
        reported = int(pltpu.get_tpu_info().vmem_capacity_bytes)
        if reported > 0:
            cap = reported
    except Exception:
        pass
    # Request at most half of physical VMEM as the scoped limit, never below
    # 32 MiB (keeps the 512x2048 f32 Pass-2 tiles pipelined even on v5e's
    # 16 MiB default scoped limit) and never above 64 MiB.
    return max(32 << 20, min(cap // 2, 64 << 20))


def _round_up(x, m):
    return ((x + m - 1) // m) * m


# ---------------------------------------------------------------------------
# Fused single-read kernel: one (1, C, HW) block per grid step over B.
# ---------------------------------------------------------------------------
def _fused_se_kernel(x_ref, w1t_ref, w2_ref, o_ref, *, inv_hw):
    """x_ref/o_ref: (1, C, HW); w1t_ref: (C, Cr) = fc1.weight.T; w2_ref: (C, Cr)."""
    x = x_ref[0]                                                   # (C, HW)
    xf = x.astype(jnp.float32)
    mean = jnp.sum(xf, axis=-1, keepdims=True) * inv_hw            # (C, 1)
    # fc1 + relu:  h[r] = max(0, sum_c w1[r, c] * mean[c])  -> (1, Cr)
    h = jnp.maximum(jnp.sum(w1t_ref[...] * mean, axis=0, keepdims=True), 0.0)
    # fc2 + sigmoid:  g[c] = sigmoid(sum_r w2[c, r] * h[r]) -> (C, 1)
    g = jax.nn.sigmoid(jnp.sum(w2_ref[...] * h, axis=-1, keepdims=True))
    o_ref[0] = x * g.astype(x.dtype)


# ---------------------------------------------------------------------------
# Two-pass fallback: Pass 1 (squeeze / spatial sum).
# ---------------------------------------------------------------------------
def _sum_kernel(x_ref, sum_ref, acc_ref, *, hw, tile_hw, chunked):
    """x_ref: (tbc, thw); sum_ref: (tbc, 1) f32 (resident over HW axis);
    acc_ref: (tbc, 128) f32 lane-dense VMEM accumulator scratch."""
    j = pl.program_id(1)
    last = pl.num_programs(1) - 1

    @pl.when(j == 0)
    def _():
        acc_ref[...] = jnp.zeros_like(acc_ref)

    def accumulate(xv):
        if chunked:
            # Lane-dense accumulation: pure VALU adds into (tbc, 128); the
            # cross-lane (XLU) reduce is deferred to the epilogue.
            for o in range(tile_hw // 128):
                acc_ref[...] += xv[:, o * 128:(o + 1) * 128]
        else:
            acc_ref[:, :1] += jnp.sum(xv, axis=-1, keepdims=True)

    x = x_ref[...].astype(jnp.float32)
    if hw % tile_hw != 0:
        # Only the last HW tile is partial: mask it there, accumulate the full
        # tiles unmasked (keeps the pass mem-bound for bf16/fp8 inputs too).
        @pl.when(j == last)
        def _():
            col = j * tile_hw + lax.broadcasted_iota(jnp.int32, x.shape, 1)
            accumulate(jnp.where(col < hw, x, 0.0))

        @pl.when(j != last)
        def _():
            accumulate(x)
    else:
        accumulate(x)

    @pl.when(j == last)
    def _():
        if chunked:
            sum_ref[...] = jnp.sum(acc_ref[...], axis=-1, keepdims=True)
        else:
            sum_ref[...] = acc_ref[:, :1]


# ---------------------------------------------------------------------------
# Two-pass fallback: Pass 2 (excite / broadcast scale).
# ---------------------------------------------------------------------------
def _scale_kernel(x_ref, g_ref, o_ref):
    """o = x * gate; gate already in x.dtype, broadcast along the lane axis."""
    o_ref[...] = x_ref[...] * g_ref[...]


# ---------------------------------------------------------------------------
# Wrapper.
# ---------------------------------------------------------------------------
def se_attention(x, w1, w2, *, tile_hw=2048, tile_bc=512,
                 force_two_pass=False, donate_x=False):
    """x: (B, C, H, W) NCHW; w1: (Cr, C); w2: (C, Cr) (torch nn.Linear layout)."""
    B, C, H, W = x.shape
    HW = H * W
    BC = B * C
    Cr = w1.shape[0]
    itemsize = x.dtype.itemsize
    vmem_limit = _vmem_limit_bytes()

    # ---- Fused single-read path: per-batch slab resident in VMEM. ----
    slab_bytes = C * HW * itemsize
    # in + out blocks, double-buffered ~= 4x slab; keep <= ~80% of scoped limit.
    if not force_two_pass and slab_bytes <= vmem_limit // 5:
        x3 = x.reshape(B, C, HW)
        w1t = jnp.asarray(w1, jnp.float32).T   # (C, Cr)
        w2f = jnp.asarray(w2, jnp.float32)     # (C, Cr)
        out3 = pl.pallas_call(
            functools.partial(_fused_se_kernel, inv_hw=float(1.0 / HW)),
            out_shape=jax.ShapeDtypeStruct((B, C, HW), x.dtype),
            grid=(B,),
            in_specs=[
                pl.BlockSpec((1, C, HW), lambda b: (b, 0, 0)),
                pl.BlockSpec((C, Cr), lambda b: (0, 0)),
                pl.BlockSpec((C, Cr), lambda b: (0, 0)),
            ],
            out_specs=pl.BlockSpec((1, C, HW), lambda b: (b, 0, 0)),
            compiler_params=pltpu.CompilerParams(
                dimension_semantics=("parallel",),
                vmem_limit_bytes=vmem_limit),
            cost_estimate=pl.CostEstimate(
                flops=int(3 * B * C * HW),
                transcendentals=int(B * C),
                bytes_accessed=int(2 * B * C * HW * itemsize)),
            input_output_aliases=({0: 0} if donate_x else {}),
        )(x3, w1t, w2f)
        return out3.reshape(B, C, H, W)

    # ---- Two-pass fallback for slabs too large to hold resident. ----
    x2 = x.reshape(BC, HW)

    # Lane dim: multiple of 128 (tile_hw=2048) or the full extent.
    thw = HW if HW <= tile_hw else tile_hw
    # Sublane dim: multiple of 8 or the full extent; keep grid_bc >= 2 when
    # possible so the 'parallel' BC axis splits across both v7x TensorCores.
    if BC <= 8:
        tbc = BC
    else:
        tbc = min(tile_bc, _round_up(pl.cdiv(BC, 2), 8))
    grid_bc = pl.cdiv(BC, tbc)
    grid_hw = pl.cdiv(HW, thw)
    chunked = (thw % 128 == 0)

    # Pass 1: streaming spatial-sum reduction (squeeze).
    sums = pl.pallas_call(
        functools.partial(_sum_kernel, hw=HW, tile_hw=thw, chunked=chunked),
        out_shape=jax.ShapeDtypeStruct((BC, 1), jnp.float32),
        grid=(grid_bc, grid_hw),
        in_specs=[pl.BlockSpec((tbc, thw), lambda i, j: (i, j))],
        out_specs=pl.BlockSpec((tbc, 1), lambda i, j: (i, 0)),
        scratch_shapes=[pltpu.VMEM((tbc, 128), jnp.float32)],
        compiler_params=pltpu.CompilerParams(
            dimension_semantics=("parallel", "arbitrary"),
            vmem_limit_bytes=vmem_limit),
        cost_estimate=pl.CostEstimate(
            flops=int(BC * HW), transcendentals=0,
            bytes_accessed=int(BC * HW * itemsize + BC * 4)),
    )(x2)

    # Excitation MLP on the tiny pooled (B, C) vector: plain JAX.
    y = sums.reshape(B, C) * jnp.float32(1.0 / HW)                 # true mean
    h = jnp.maximum(y @ w1.T.astype(jnp.float32), 0.0)             # (B, Cr)
    gate = jax.nn.sigmoid(h @ w2.T.astype(jnp.float32))            # (B, C) f32
    gate = gate.astype(x.dtype).reshape(BC, 1)                     # pre-cast

    # Pass 2: streaming scale with lane-dense output tiles.
    out2 = pl.pallas_call(
        _scale_kernel,
        out_shape=jax.ShapeDtypeStruct((BC, HW), x.dtype),
        grid=(grid_bc, grid_hw),
        in_specs=[
            pl.BlockSpec((tbc, thw), lambda i, j: (i, j)),   # x tile
            pl.BlockSpec((tbc, 1), lambda i, j: (i, 0)),     # gate (resident)
        ],
        out_specs=pl.BlockSpec((tbc, thw), lambda i, j: (i, j)),
        compiler_params=pltpu.CompilerParams(
            dimension_semantics=("parallel", "parallel"),
            vmem_limit_bytes=vmem_limit),
        cost_estimate=pl.CostEstimate(
            flops=int(BC * HW), transcendentals=0,
            bytes_accessed=int(2 * BC * HW * itemsize + BC * itemsize)),
        input_output_aliases=({0: 0} if donate_x else {}),
    )(x2, gate)

    return out2.reshape(B, C, H, W)


def se_attention_ref(x, w1, w2):
    """Plain-JAX reference matching the PyTorch SEAttention forward."""
    y = jnp.mean(x.astype(jnp.float32), axis=(2, 3))               # (B, C)
    y = jnp.maximum(y @ w1.T.astype(jnp.float32), 0.0)             # (B, Cr)
    y = jax.nn.sigmoid(y @ w2.T.astype(jnp.float32))               # (B, C)
    return (x.astype(jnp.float32) * y[:, :, None, None]).astype(x.dtype)


if __name__ == "__main__":
    # Small shapes consistent with the module: channel=4, reduction=2.
    B, C, H, W = 2, 4, 16, 16
    reduction = 2
    Cr = C // reduction

    key = jax.random.PRNGKey(0)
    kx, k1, k2 = jax.random.split(key, 3)

    x = jax.random.normal(kx, (B, C, H, W), dtype=jnp.float32)
    # Deterministic synthetic weights (torch nn.Linear layout, bias=False).
    w1 = jax.random.normal(k1, (Cr, C), dtype=jnp.float32) * 0.5
    w2 = jax.random.normal(k2, (C, Cr), dtype=jnp.float32) * 0.5

    ref = se_attention_ref(x, w1, w2)

    # Fused single-read path (used for small slabs).
    out_fused = jax.block_until_ready(se_attention(x, w1, w2))
    assert out_fused.shape == (B, C, H, W)
    assert jnp.allclose(out_fused, ref, atol=1e-5, rtol=1e-5), "fused mismatch"

    # Two-pass streaming fallback (exercised explicitly for coverage).
    out_2p = jax.block_until_ready(se_attention(x, w1, w2, force_two_pass=True))
    assert out_2p.shape == (B, C, H, W)
    assert jnp.allclose(out_2p, ref, atol=1e-5, rtol=1e-5), "two-pass mismatch"

    print("KERNEL_OK")
</pallas_src>

<mosaic_0001>
module attributes {stable_mosaic.version = 11 : i64} {
  func.func @_fused_se_kernel(%arg0: i32, %arg1: memref<1x4x256xf32, #tpu.memory_space<vmem>>, %arg2: memref<4x2xf32, #tpu.memory_space<vmem>>, %arg3: memref<4x2xf32, #tpu.memory_space<vmem>>, %arg4: memref<1x4x256xf32, #tpu.memory_space<vmem>>) attributes {dimension_semantics = [#tpu.dimension_semantics<parallel>], iteration_bounds = array<i64: 2>, scalar_prefetch = 0 : i64, scratch_operands = 0 : i64, tpu.core_type = #tpu.core_type<tc>, window_params = [{transform_indices = @transform_0, window_bounds = array<i64: 1, 4, 256>}, {pipeline_mode = #tpu.pipeline_mode<synchronous>, transform_indices = @transform_1, window_bounds = array<i64: 4, 2>}, {pipeline_mode = #tpu.pipeline_mode<synchronous>, transform_indices = @transform_2, window_bounds = array<i64: 4, 2>}, {transform_indices = @transform_3, window_bounds = array<i64: 1, 4, 256>}]} {
    %c0 = arith.constant 0 : index
    %c0_0 = arith.constant 0 : index
    %c0_1 = arith.constant 0 : index
    %0 = vector.load %arg1[%c0, %c0_0, %c0_1] : memref<1x4x256xf32, #tpu.memory_space<vmem>>, vector<1x4x256xf32>
    %1 = vector.shape_cast %0 : vector<1x4x256xf32> to vector<4x256xf32>
    %cst = arith.constant dense<0.000000e+00> : vector<4xf32>
    %2 = vector.multi_reduction <add>, %1, %cst [1] : vector<4x256xf32> to vector<4xf32>
    %3 = vector.shape_cast %2 : vector<4xf32> to vector<4x1xf32>
    %cst_2 = arith.constant 3.906250e-03 : f32
    %4 = vector.broadcast %cst_2 : f32 to vector<4x1xf32>
    %5 = arith.mulf %3, %4 : vector<4x1xf32>
    %c0_3 = arith.constant 0 : index
    %c0_4 = arith.constant 0 : index
    %6 = vector.load %arg2[%c0_3, %c0_4] : memref<4x2xf32, #tpu.memory_space<vmem>>, vector<4x2xf32>
    %7 = vector.broadcast %5 : vector<4x1xf32> to vector<4x2xf32>
    %8 = arith.mulf %6, %7 : vector<4x2xf32>
    %cst_5 = arith.constant dense<0.000000e+00> : vector<2xf32>
    %9 = vector.multi_reduction <add>, %8, %cst_5 [0] : vector<4x2xf32> to vector<2xf32>
    %10 = vector.shape_cast %9 : vector<2xf32> to vector<1x2xf32>
    %cst_6 = arith.constant 0.000000e+00 : f32
    %11 = vector.broadcast %cst_6 : f32 to vector<1x2xf32>
    %12 = arith.maximumf %10, %11 : vector<1x2xf32>
    %c0_7 = arith.constant 0 : index
    %c0_8 = arith.constant 0 : index
    %13 = vector.load %arg3[%c0_7, %c0_8] : memref<4x2xf32, #tpu.memory_space<vmem>>, vector<4x2xf32>
    %14 = vector.broadcast %12 : vector<1x2xf32> to vector<4x2xf32>
    %15 = arith.mulf %13, %14 : vector<4x2xf32>
    %cst_9 = arith.constant dense<0.000000e+00> : vector<4xf32>
    %16 = vector.multi_reduction <add>, %15, %cst_9 [1] : vector<4x2xf32> to vector<4xf32>
    %17 = vector.shape_cast %16 : vector<4xf32> to vector<4x1xf32>
    %18 = arith.negf %17 : vector<4x1xf32>
    %19 = math.exp %18 : vector<4x1xf32>
    %cst_10 = arith.constant 1.000000e+00 : f32
    %20 = vector.broadcast %cst_10 : f32 to vector<4x1xf32>
    %21 = arith.addf %20, %19 : vector<4x1xf32>
    %22 = arith.divf %20, %21 : vector<4x1xf32>
    %23 = vector.broadcast %22 : vector<4x1xf32> to vector<4x256xf32>
    %24 = arith.mulf %1, %23 : vector<4x256xf32>
    %c0_11 = arith.constant 0 : index
    %c0_12 = arith.constant 0 : index
    %c0_13 = arith.constant 0 : index
    %25 = vector.load %arg4[%c0_11, %c0_12, %c0_13] : memref<1x4x256xf32, #tpu.memory_space<vmem>>, vector<1x4x256xf32>
    %26 = vector.shape_cast %25 : vector<1x4x256xf32> to vector<4x256xf32>
    %27 = vector.shape_cast %24 : vector<4x256xf32> to vector<1x4x256xf32>
    tpu.vector_store %arg4[%c0_11, %c0_12, %c0_13], %27 {strides = array<i32>} : memref<1x4x256xf32, #tpu.memory_space<vmem>>, vector<1x4x256xf32>,
    return
  }
  func.func @transform_0(%arg0: i32) -> (i32, i32, i32) {
    %c0_i32 = arith.constant 0 : i32
    %c0_i32_0 = arith.constant 0 : i32
    %c0_i32_1 = arith.constant 0 : i32
    return %arg0, %c0_i32, %c0_i32_0 : i32, i32, i32
  }
  func.func @transform_1(%arg0: i32) -> (i32, i32) {
    %c0_i32 = arith.constant 0 : i32
    %c0_i32_0 = arith.constant 0 : i32
    %c0_i32_1 = arith.constant 0 : i32
    return %c0_i32, %c0_i32_0 : i32, i32
  }
  func.func @transform_2(%arg0: i32) -> (i32, i32) {
    %c0_i32 = arith.constant 0 : i32
    %c0_i32_0 = arith.constant 0 : i32
    %c0_i32_1 = arith.constant 0 : i32
    return %c0_i32, %c0_i32_0 : i32, i32
  }
  func.func @transform_3(%arg0: i32) -> (i32, i32, i32) {
    %c0_i32 = arith.constant 0 : i32
    %c0_i32_0 = arith.constant 0 : i32
    %c0_i32_1 = arith.constant 0 : i32
    return %arg0, %c0_i32, %c0_i32_0 : i32, i32, i32
  }
}

</mosaic_0001>

<llo_original>
// kernel: tpu_custom_call.1
$region0: #{tpu_custom_call.1}
  #allocation0 [shape = 'u32[]', space=smem, size = 0x4, offset = 0x4, fixed_abs, tag = 'smem constant byte address 0x4 - core index']
  #allocation1 [shape = 'u32[72,128]{1,0:T(1,128)}', space=vmem, size = 0x9000, scoped, tag = 'internal scratch']
  %s0 = inlined_call_operand.hbm [shape: f32[2,4,256], index: 0, kind: input, shape index: {}]
  %s1 = inlined_call_operand.vmem [shape: f32[4,2], index: 1, kind: input, shape index: {}]
  %s2 = inlined_call_operand.vmem [shape: f32[4,2], index: 2, kind: input, shape index: {}]
  %s3 = inlined_call_operand.hbm [shape: f32[2,4,256], index: 3, kind: output, shape index: {}]
  %s4 = sld [smem:[#allocation0]]
  $region49: #{tpu_custom_call.1} parent=0
    _
  %s6 = ssub.s32 1, %s4
  %s7 = scalar_select 0, %s6, %s4
  $region1: #{tpu_custom_call.1} parent=0
    #allocation2 [shape = 'u8[8192]{0}', space=vmem, size = 0x2000, scoped, tag = 'input window, operand 0']
    #allocation3 [shape = 's32[2]{0}', space=sflag, size = 0x8, scoped, tag = 'scoped memory for tpu_custom_call.1']
    #allocation4 [shape = 's32[2]{0}', space=sflag, size = 0x8, scoped, tag = 'scoped memory for tpu_custom_call.1']
    #allocation5 [shape = 'u8[8192]{0}', space=vmem, size = 0x2000, scoped, tag = 'output window, operand 0']
    %8 = vsyncpa [#allocation3], 0
    %s9 = scalar_lea.sflag [#allocation3], 1
    %10 = vsyncpa %s9, 0
    %11 = vsyncpa [#allocation4], 0
    %s12 = scalar_lea.sflag [#allocation4], 1
    %13 = vsyncpa %s12, 0
    loop: start=0, step=1, limit=4
    $region2: #{tpu_custom_call.1} parent=1 // loop_pre_header
      _
    $region3: #{tpu_custom_call.1} parent=1 // loop_header
      %s15 = sphi 0, %s19
      %p16 = scmp.ge.s32.totalorder %s15, 4
      %s25 = sphi 0, %s27
      %s28 = sphi 0, %s25
      %s29 = sphi 0, %s28
      %s45 = sphi 0, %s29
      %s49 = sphi 0, %s49
      %s51 = sphi 0, %s49
      %s52 = sphi 0, %s51
      %s66 = sphi 0, %s52
      %s70 = sphi 0, %s70
      %s72 = sphi 0, %s70
      %s73 = sphi 0, %s72
      %s87 = sphi 0, %s73
      %s93 = sphi 0, %s95
      %s96 = sphi 0, %s93
      %s97 = sphi 0, %s96
      %s113 = sphi 0, %s97
    $region4: #{tpu_custom_call.1} parent=1 // loop_header_branch
      %18 = sbr.rel (%p16) target = $region8
    $region5: #{tpu_custom_call.1} parent=1 // loop_body
      %s20 = ssub.s32 %s15, 1
      %s21 = ssub.s32 %s15, 2
      %s22 = sadd.s32 %s15, 1
      %s23 = ssub.s32 %s15, %s22
      %p24 = scmp.eq.s32.totalorder %s23, 0
      %s26 = sadd.s32 %s25, 1
      %s27 = scalar_select %p24, %s25, %s26
      %p30 = pneg %p24
      %p31 = scmp.eq.s32.totalorder %s15, 1
      %p32 = por %p30, %p31
      %p33 = scmp.ne.s32.totalorder %s25, %s28
      %p34 = scmp.eq.s32.totalorder %s15, 0
      %p35 = por %p33, %p34
      %p36 = scmp.ne.s32.totalorder %s25, %s28
      %p37 = scmp.eq.s32.totalorder %s20, 1
      %p38 = por %p36, %p37
      %p39 = scmp.ne.s32.totalorder %s28, %s29
      %p40 = scmp.eq.s32.totalorder %s20, 0
      %p41 = por %p39, %p40
      %p42 = scmp.ne.s32.totalorder %s28, %s29
      %p43 = scmp.eq.s32.totalorder %s21, 1
      %p44 = por %p42, %p43
      %p46 = scmp.ne.s32.totalorder %s29, %s45
      %p47 = scmp.eq.s32.totalorder %s21, 0
      %p48 = por %p46, %p47
      %s50 = sadd.s32 %s49, 1
      %p53 = scmp.eq.s32.totalorder %s15, 1
      %p54 = scmp.ne.s32.totalorder %s49, %s51
      %p55 = scmp.eq.s32.totalorder %s15, 0
      %p56 = por %p54, %p55
      %p57 = scmp.ne.s32.totalorder %s49, %s51
      %p58 = scmp.eq.s32.totalorder %s20, 1
      %p59 = por %p57, %p58
      %p60 = scmp.ne.s32.totalorder %s51, %s52
      %p61 = scmp.eq.s32.totalorder %s20, 0
      %p62 = por %p60, %p61
      %p63 = scmp.ne.s32.totalorder %s51, %s52
      %p64 = scmp.eq.s32.totalorder %s21, 1
      %p65 = por %p63, %p64
      %p67 = scmp.ne.s32.totalorder %s52, %s66
      %p68 = scmp.eq.s32.totalorder %s21, 0
      %p69 = por %p67, %p68
      %s71 = sadd.s32 %s70, 1
      %p74 = scmp.eq.s32.totalorder %s15, 1
      %p75 = scmp.ne.s32.totalorder %s70, %s72
      %p76 = scmp.eq.s32.totalorder %s15, 0
      %p77 = por %p75, %p76
      %p78 = scmp.ne.s32.totalorder %s70, %s72
      %p79 = scmp.eq.s32.totalorder %s20, 1
      %p80 = por %p78, %p79
      %p81 = scmp.ne.s32.totalorder %s72, %s73
      %p82 = scmp.eq.s32.totalorder %s20, 0
      %p83 = por %p81, %p82
      %p84 = scmp.ne.s32.totalorder %s72, %s73
      %p85 = scmp.eq.s32.totalorder %s21, 1
      %p86 = por %p84, %p85
      %p88 = scmp.ne.s32.totalorder %s73, %s87
      %p89 = scmp.eq.s32.totalorder %s21, 0
      %p90 = por %p88, %p89
      %s91 = ssub.s32 %s15, %s22
      %p92 = scmp.eq.s32.totalorder %s91, 0
      %s94 = sadd.s32 %s93, 1
      %s95 = scalar_select %p92, %s93, %s94
      %p98 = pneg %p92
      %p99 = scmp.eq.s32.totalorder %s15, 1
      %p100 = por %p98, %p99
      %p101 = scmp.ne.s32.totalorder %s93, %s96
      %p102 = scmp.eq.s32.totalorder %s15, 0
      %p103 = por %p101, %p102
      %p104 = scmp.ne.s32.totalorder %s93, %s96
      %p105 = scmp.eq.s32.totalorder %s20, 1
      %p106 = por %p104, %p105
      %p107 = scmp.ne.s32.totalorder %s96, %s97
      %p108 = scmp.eq.s32.totalorder %s20, 0
      %p109 = por %p107, %p108
      %p110 = scmp.ne.s32.totalorder %s96, %s97
      %p111 = scmp.eq.s32.totalorder %s21, 1
      %p112 = por %p110, %p111
      %p114 = scmp.ne.s32.totalorder %s97, %s113
      %p115 = scmp.eq.s32.totalorder %s21, 0
      %p116 = por %p114, %p115
      %p117 = scmp.le.s32.totalorder 1, %s15
      %p118 = scmp.lt.s32.totalorder %s15, 3
      %p119 = pnand %p117, %p118
      %p120 = pneg %p119
      // Predicated region
      $region9: #{tpu_custom_call.1} parent=5 // pred_check
        _
      $region10: #{tpu_custom_call.1} parent=5 // pred_check_branch
        %122 = sbr.rel (%p119) target = $region12
      $region11: #{tpu_custom_call.1} parent=5 // pred_region
        %s123 = ssub.s32 %s15, 1
        // Predicated region
        $region13: #{tpu_custom_call.1} parent=11 // pred_check
          %p124 = pneg %p62
        $region14: #{tpu_custom_call.1} parent=11 // pred_check_branch
          %126 = sbr.rel (%p124) target = $region16
        $region15: #{tpu_custom_call.1} parent=11 // pred_region
          _
        $region16: #{tpu_custom_call.1} parent=11 // pred_fallthru
          _
        // Predicated region
        $region17: #{tpu_custom_call.1} parent=11 // pred_check
          %p127 = pneg %p83
        $region18: #{tpu_custom_call.1} parent=11 // pred_check_branch
          %129 = sbr.rel (%p127) target = $region20
        $region19: #{tpu_custom_call.1} parent=11 // pred_region
          _
        $region20: #{tpu_custom_call.1} parent=11 // pred_fallthru
          _
      $region12: #{tpu_custom_call.1} parent=5 // pred_fallthru
        _
      %p130 = scmp.lt.s32.totalorder %s15, 2
      // Predicated region
      $region21: #{tpu_custom_call.1} parent=5 // pred_check
        %p131 = pneg %p130
      $region22: #{tpu_custom_call.1} parent=5 // pred_check_branch
        %133 = sbr.rel (%p131) target = $region24
      $region23: #{tpu_custom_call.1} parent=5 // pred_region
        // Predicated region
        $region25: #{tpu_custom_call.1} parent=23 // pred_check
          %p134 = pneg %p35
        $region26: #{tpu_custom_call.1} parent=23 // pred_check_branch
          %136 = sbr.rel (%p134) target = $region28
        $region27: #{tpu_custom_call.1} parent=23 // pred_region
          %s137 = sand.u32 %s25, 1
          %s138 = scalar_lea.sflag [#allocation3], %s137
          %s139 = sand.u32 %s25, 1
          %s140 = smul.addr %s139, 8
          %s141 = scalar_lea.vmem [#allocation2], %s140
          %143 = vsyncadd %s138, 0
          %s144 = smul.addr %s15, 2
          %s145 = smul.addr %s144, 4
          %s146 = scalar_lea.hbm %s0, %s145
          %s148 = sshll.u32 %s146, 4
          %s149 = int_to_ptr.hbm [resolvable:$true] %s148
          %s150 = sshll.u32 %s141, 4
          %s151 = int_to_ptr.vmem [resolvable:$true] %s150
          %153 = dma.hbm_to_vmem [thread:$0]  %s149, 128, %s151, %s138
        $region28: #{tpu_custom_call.1} parent=23 // pred_fallthru
          _
      $region24: #{tpu_custom_call.1} parent=5 // pred_fallthru
        _
      %p154 = scmp.le.s32.totalorder 1, %s15
      %p155 = scmp.lt.s32.totalorder %s15, 3
      %p156 = pnand %p154, %p155
      %p157 = pneg %p156
      // Predicated region
      $region29: #{tpu_custom_call.1} parent=5 // pred_check
        _
      $region30: #{tpu_custom_call.1} parent=5 // pred_check_branch
        %159 = sbr.rel (%p156) target = $region32
      $region31: #{tpu_custom_call.1} parent=5 // pred_region
        %s160 = ssub.s32 %s15, 1
        %s161 = sand.u32 %s28, 1
        %s162 = scalar_lea.sflag [#allocation3], %s161
        %s163 = sand.u32 %s28, 1
        %s164 = smul.addr %s163, 8
        %s165 = scalar_lea.vmem [#allocation2], %s164
        // Predicated region
        $region33: #{tpu_custom_call.1} parent=31 // pred_check
          %p166 = pneg %p41
        $region34: #{tpu_custom_call.1} parent=31 // pred_check_branch
          %168 = sbr.rel (%p166) target = $region36
        $region35: #{tpu_custom_call.1} parent=31 // pred_region
          %170 = dma.done %s162, 128
        $region36: #{tpu_custom_call.1} parent=31 // pred_fallthru
          _
        %s171 = sand.u32 %s28, 1
        %s172 = scalar_lea.sflag [#allocation3], %s171
        %s173 = sand.u32 %s28, 1
        %s174 = smul.addr %s173, 8
        %s175 = scalar_lea.vmem [#allocation2], %s174
        %p176 = pneg %p41
        %p177 = pneg %p38
        %p178 = pneg %p62
        %p179 = pneg %p59
        %p180 = pneg %p83
        %p181 = pneg %p80
        %p182 = pneg %p109
        %p183 = pneg %p106
        %s184 = sand.u32 %s96, 1
        %s185 = scalar_lea.sflag [#allocation4], %s184
        %s186 = sand.u32 %s96, 1
        %s187 = smul.addr %s186, 8
        %s188 = scalar_lea.vmem [#allocation5], %s187
        %v189 = vld [vmem:[%s165] sm:$0xff]
        %191 = vst [vmem:[#allocation1] ss:$2 sm:$0xff] %v189
        %v192 = vld.sshfl [vmem:[#allocation1] sm:$0xff pattern:$0x75316420]
        %v193 = vld.sshfl [vmem:[#allocation1 + $0x8] sm:$0xff pattern:$0x75316420]
        %vm196 = vcmask 1043456
        %v197 = vsel %vm196, %v192, 0.0
        %v198 = vsel %vm196, %v193, 0.0
        %v199 = vadd.f32 %v197, %v198
        %200 = vadd.xlane.f32.xlu0 %v199
        %v201 = vpop.xlane.xlu0 %200
        %v202 = vmul.f32 %v201, 0.00390625
        %v203 = vld [vmem:[%s1] sm:$0xf]
        %v204 = vmul.f32 %v203, %v202
        %vm205 = vcmask 11264
        %v206 = vsel %vm205, %v204, 0.0
        %v207 = vrot.slane %v206, 4
        %v208 = vadd.f32 %v206, %v207
        %v209 = vrot.slane %v208, 2
        %v210 = vadd.f32 %v208, %v209
        %v211 = vrot.slane %v210, 1
        %v212 = vadd.f32 %v210, %v211
        %v213 = vmax.f32 %v212, 0.0
        %v214 = vld [vmem:[%s2] sm:$0xf]
        %v215 = vmul.f32 %v214, %v213
        %v216 = vsel %vm205, %v215, 0.0
        %217 = vadd.xlane.f32.xlu0 %v216
        %v218 = vpop.xlane.xlu0 %217
        %v219 = vxor.u32 %v218, 2147483648
        %v220 = vmul.f32 %v219, 1.442695
        %v221 = vpow.pop %v220
        %v222 = vadd.f32 %v221, 1.0
        %v223 = vrcp.pop %v222
        %v224 = vmul.f32 %v222, %v223
        %v225 = vsub.f32 1.0, %v224
        %v226 = vmul.f32 %v223, %v225
        %v227 = vadd.f32 %v223, %v226
        %vm228 = vweird.f32 %v222
        %vm229 = vweird.f32 %v223
        %vm230 = vmor %vm228, %vm229
        %v231 = vsel %vm230, %v223, %v227
        %v232 = vand.u32 2147483647, %v222
        %vm233 = vcmp.eq.f32.partialorder %v232, 8.507059e+37
        %v234 = vand.u32 %v222, 2147483648
        %v235 = vor.u32 1.1754944e-38, %v234
        %v236 = vsel %vm233, %v235, %v231
        %v237 = vmul.f32 1.0, %v236
        %v240 = vunpack.c.l.s4 839922192
        %v241 = vunpack.c.0.s8 %v240
        %v242 = vperm.slane %v237, %v241
        %v244 = vmul.f32 %v189, %v242
        %245 = vst [vmem:[%s188] sm:$0xff] %v244
        %s246 = sand.u32 %s96, 1
        %s247 = scalar_lea.sflag [#allocation4], %s246
        %s248 = sand.u32 %s96, 1
        %s249 = smul.addr %s248, 8
        %s250 = scalar_lea.vmem [#allocation5], %s249
        // Predicated region
        $region37: #{tpu_custom_call.1} parent=31 // pred_check
          %p251 = pneg %p106
        $region38: #{tpu_custom_call.1} parent=31 // pred_check_branch
          %253 = sbr.rel (%p251) target = $region40
        $region39: #{tpu_custom_call.1} parent=31 // pred_region
          %255 = vsyncadd %s247, 0
          %s256 = smul.addr %s20, 2
          %s257 = smul.addr %s256, 4
          %s258 = scalar_lea.hbm %s3, %s257
          %s260 = sshll.u32 %s250, 4
          %s261 = int_to_ptr.vmem [resolvable:$true] %s260
          %s262 = sshll.u32 %s258, 4
          %s263 = int_to_ptr.hbm [resolvable:$true] %s262
          %265 = dma.vmem_to_hbm [thread:$0]  %s261, 128, %s263, %s247
        $region40: #{tpu_custom_call.1} parent=31 // pred_fallthru
          _
      $region32: #{tpu_custom_call.1} parent=5 // pred_fallthru
        _
      %p266 = scmp.le.s32.totalorder 2, %s15
      // Predicated region
      $region41: #{tpu_custom_call.1} parent=5 // pred_check
        %p267 = pneg %p266
      $region42: #{tpu_custom_call.1} parent=5 // pred_check_branch
        %269 = sbr.rel (%p267) target = $region44
      $region43: #{tpu_custom_call.1} parent=5 // pred_region
        %s270 = ssub.s32 %s15, 2
        // Predicated region
        $region45: #{tpu_custom_call.1} parent=43 // pred_check
          %p271 = pneg %p112
        $region46: #{tpu_custom_call.1} parent=43 // pred_check_branch
          %273 = sbr.rel (%p271) target = $region48
        $region47: #{tpu_custom_call.1} parent=43 // pred_region
          %s274 = sand.u32 %s97, 1
          %s275 = scalar_lea.sflag [#allocation4], %s274
          %s276 = sand.u32 %s97, 1
          %s277 = smul.addr %s276, 8
          %s278 = scalar_lea.vmem [#allocation5], %s277
          %280 = dma.done %s275, 128
        $region48: #{tpu_custom_call.1} parent=43 // pred_fallthru
          _
      $region44: #{tpu_custom_call.1} parent=5 // pred_fallthru
        _
    $region6: #{tpu_custom_call.1} parent=1 // loop_footer
      %s19 = sadd.s32 1, %s15
    $region7: #{tpu_custom_call.1} parent=1 // loop_footer_branch
      %14 = sbr.rel target = $region3
    $region8: #{tpu_custom_call.1} parent=1 // loop_exit
      _
    %281 = vsyncpa [#allocation3], 1
    %s282 = scalar_lea.sflag [#allocation3], 1
    %283 = vsyncpa %s282, 1
    %284 = vsyncpa [#allocation4], 1
    %s285 = scalar_lea.sflag [#allocation4], 1
    %286 = vsyncpa %s285, 1

</llo_original>
